<compile_context>
chip_gen: v6e
topology: v6e:2x2x1
jax: 0.10.0
libtpu: 0.0.40
codegen_flags: <defaults>
</compile_context>

<pallas_src>
import jax
import jax.numpy as jnp
from jax.experimental import pallas as pl
from jax.experimental.pallas import tpu as pltpu


def _round_up(x, m):
    return ((x + m - 1) // m) * m


def _ianns_kernel(x1_ref, x2_ref, w1_ref, w2_ref, b_ref, o_ref):
    # Two MXU dots (K = F+I, N = 64 lanes each), f32 accumulation, f32 bias add,
    # one lane-dense (128-wide) store per batch tile.  Inputs are cast to the
    # weight dtype *inside* the kernel (no extra HBM round trip in the wrapper).
    cd = w1_ref.dtype
    d1 = jnp.dot(x1_ref[...].astype(cd), w1_ref[...], preferred_element_type=jnp.float32)
    d2 = jnp.dot(x2_ref[...].astype(cd), w2_ref[...], preferred_element_type=jnp.float32)
    o_ref[...] = (jnp.concatenate([d1, d2], axis=1) + b_ref[...]).astype(o_ref.dtype)


def precompute_fused_params(params, *, compute_dtype=jnp.bfloat16):
    """Fold the shared decoder into each head and pad each head to 64 lanes.

    Call once at inference time (frozen params) and pass the result via `fused=`;
    for training, identity_aware_forward recomputes this from live params each call.
    """
    w_dec, b_dec = params["w_dec"], params["b_dec"]          # [I, F], [1, F]
    out_dim = params["w_norm1"].shape[1]
    head_pad = _round_up(out_dim, 64)                        # 2*head_pad is a multiple of 128

    def compose(w_norm, b_norm):
        w_comb = jnp.concatenate([w_norm, w_dec @ w_norm], axis=0)     # [F+I, out]
        b_comb = b_dec @ w_norm + b_norm                               # [1, out]
        w_pad = jnp.zeros((w_comb.shape[0], head_pad), jnp.float32).at[:, :out_dim].set(w_comb)
        b_pad = jnp.zeros((1, head_pad), jnp.float32).at[:, :out_dim].set(b_comb)
        return w_pad.astype(compute_dtype), b_pad                      # bias stays f32

    w1p, b1p = compose(params["w_norm1"], params["b_norm1"])
    w2p, b2p = compose(params["w_norm2"], params["b_norm2"])
    b_big = jnp.concatenate([b1p, b2p], axis=1)                        # [1, 2*head_pad] f32
    return {"w1": w1p, "w2": w2p, "b": b_big, "out_dim": out_dim, "head_pad": head_pad}


def identity_aware_forward(x1, x2, params=None, *, fused=None, tm=1024,
                           compute_dtype=jnp.bfloat16, out_dtype=jnp.float32,
                           return_padded=False):
    """Forward pass. x1, x2: [B, in_features + in_identity] float32.
    Returns [o1, o2], each [B, 50] in out_dtype (or the padded [B, 128] slab)."""
    if fused is None:
        fused = precompute_fused_params(params, compute_dtype=compute_dtype)
    w1, w2, b_big = fused["w1"], fused["w2"], fused["b"]
    out_dim, head_pad = fused["out_dim"], fused["head_pad"]

    B, FI = x1.shape
    assert x2.shape == (B, FI) and w1.shape[0] == FI
    N = 2 * head_pad                                  # 128 for out_dim=50

    # Batch tile: multiple of 8 (or full B when tiny); shrink so the grid has >=2 steps
    # for mid-sized B (lets the "parallel" axis span both TCs on v7x).
    if B <= 8:
        tm_eff = B
    else:
        tm_eff = max(8, min(tm, _round_up(pl.cdiv(B, 2), 8)))
    grid = (pl.cdiv(B, tm_eff),)                      # no batch padding; ragged last block OK

    out = pl.pallas_call(
        _ianns_kernel,
        out_shape=jax.ShapeDtypeStruct((B, N), out_dtype),
        grid_spec=pltpu.PrefetchScalarGridSpec(
            num_scalar_prefetch=0,
            grid=grid,
            in_specs=[
                pl.BlockSpec((tm_eff, FI), lambda i: (i, 0)),                  # x1 tile
                pl.BlockSpec((tm_eff, FI), lambda i: (i, 0)),                  # x2 tile
                pl.BlockSpec(w1.shape, lambda i: (0, 0),
                             pipeline_mode=pl.Buffered(1)),                    # head-1 weights
                pl.BlockSpec(w2.shape, lambda i: (0, 0),
                             pipeline_mode=pl.Buffered(1)),                    # head-2 weights
                pl.BlockSpec((1, N), lambda i: (0, 0),
                             pipeline_mode=pl.Buffered(1)),                    # fused bias
            ],
            out_specs=pl.BlockSpec((tm_eff, N), lambda i: (i, 0)),
        ),
        compiler_params=pltpu.CompilerParams(
            dimension_semantics=("parallel",),        # v7x: shard batch over both TCs
        ),
    )(x1, x2, w1, w2, b_big)

    if return_padded:
        return out                                    # [B, 128] slab (consumer can view into it)
    return [out[:, :out_dim], out[:, head_pad:head_pad + out_dim]]


def init_params(key, in_features, in_identity, out_dim=50):
    """Deterministic init mimicking nn.Linear (uniform +/- 1/sqrt(fan_in)).
    Weights stored pre-transposed as (in, out); biases as (1, out)."""
    def linear(k, fan_in, fan_out):
        kw, kb = jax.random.split(k)
        bound = 1.0 / jnp.sqrt(fan_in)
        w = jax.random.uniform(kw, (fan_in, fan_out), jnp.float32, -bound, bound)
        b = jax.random.uniform(kb, (1, fan_out), jnp.float32, -bound, bound)
        return w, b

    k_dec, k_n1, k_n2 = jax.random.split(key, 3)
    w_dec, b_dec = linear(k_dec, in_identity, in_features)     # linear_identity_decoder (shared)
    w_n1, b_n1 = linear(k_n1, in_features, out_dim)            # linear_norm_stack
    w_n2, b_n2 = linear(k_n2, in_features, out_dim)            # linear_norm_stack2
    return {
        "w_dec": w_dec, "b_dec": b_dec,
        "w_norm1": w_n1, "b_norm1": b_n1,
        "w_norm2": w_n2, "b_norm2": b_n2,
    }


def reference_forward(x1, x2, params, *, in_features):
    dec1 = x1[:, in_features:] @ params["w_dec"] + params["b_dec"]
    dec2 = x2[:, in_features:] @ params["w_dec"] + params["b_dec"]
    mod1 = dec1 + x1[:, :in_features]
    mod2 = dec2 + x2[:, :in_features]
    o1 = mod1 @ params["w_norm1"] + params["b_norm1"]
    o2 = mod2 @ params["w_norm2"] + params["b_norm2"]
    return [o1, o2]


if __name__ == "__main__":
    in_features = 32
    in_identity = 16
    batch = 8

    key = jax.random.PRNGKey(0)
    k_params, k_x1, k_x2, k_y1, k_y2 = jax.random.split(key, 5)

    params = init_params(k_params, in_features, in_identity)
    x1 = jax.random.normal(k_x1, (batch, in_features + in_identity), jnp.float32)
    x2 = jax.random.normal(k_x2, (batch, in_features + in_identity), jnp.float32)

    ref = reference_forward(x1, x2, params, in_features=in_features)

    # 1) f32 operand path with hoisted (precomputed) fused params: tight check.
    fused_f32 = precompute_fused_params(params, compute_dtype=jnp.float32)
    out_f32 = identity_aware_forward(x1, x2, fused=fused_f32,
                                     compute_dtype=jnp.float32, out_dtype=jnp.float32)
    out_f32 = jax.block_until_ready(out_f32)
    for o, r in zip(out_f32, ref):
        assert o.shape == (batch, 50) and o.dtype == jnp.float32
        assert jnp.allclose(o, r, atol=1e-4, rtol=1e-4)

    # 2) default perf path (bf16 MXU operands, f32 accum/out), per-call composition: loose check.
    out_bf16 = identity_aware_forward(x1, x2, params)
    out_bf16 = jax.block_until_ready(out_bf16)
    for o, r in zip(out_bf16, ref):
        assert o.shape == (batch, 50) and o.dtype == jnp.float32
        assert jnp.allclose(o, r, atol=1e-1, rtol=1e-1)

    # 3) bf16 output stream (halves the dominant HBM write): loose check.
    out_bf16o = identity_aware_forward(x1, x2, params, out_dtype=jnp.bfloat16)
    out_bf16o = jax.block_until_ready(out_bf16o)
    for o, r in zip(out_bf16o, ref):
        assert o.shape == (batch, 50) and o.dtype == jnp.bfloat16
        assert jnp.allclose(o.astype(jnp.float32), r, atol=1e-1, rtol=1e-1)

    # 4) ragged batch (no padding, multi-step grid with a partial last block): exact f32 check.
    B2 = 37
    y1 = jax.random.normal(k_y1, (B2, in_features + in_identity), jnp.float32)
    y2 = jax.random.normal(k_y2, (B2, in_features + in_identity), jnp.float32)
    ref2 = reference_forward(y1, y2, params, in_features=in_features)
    out2 = identity_aware_forward(y1, y2, fused=fused_f32,
                                  compute_dtype=jnp.float32, out_dtype=jnp.float32)
    out2 = jax.block_until_ready(out2)
    for o, r in zip(out2, ref2):
        assert o.shape == (B2, 50) and o.dtype == jnp.float32
        assert jnp.allclose(o, r, atol=1e-4, rtol=1e-4)

    print("KERNEL_OK")
</pallas_src>

<mosaic_0001>
module attributes {stable_mosaic.version = 11 : i64} {
  func.func @_ianns_kernel(%arg0: i32, %arg1: memref<8x48xf32, #tpu.memory_space<vmem>>, %arg2: memref<8x48xf32, #tpu.memory_space<vmem>>, %arg3: memref<48x64xf32, #tpu.memory_space<vmem>>, %arg4: memref<48x64xf32, #tpu.memory_space<vmem>>, %arg5: memref<1x128xf32, #tpu.memory_space<vmem>>, %arg6: memref<8x128xf32, #tpu.memory_space<vmem>>) attributes {dimension_semantics = [#tpu.dimension_semantics<parallel>], iteration_bounds = array<i64: 1>, scalar_prefetch = 0 : i64, scratch_operands = 0 : i64, tpu.core_type = #tpu.core_type<tc>, window_params = [{transform_indices = @transform_0, window_bounds = array<i64: 8, 48>}, {transform_indices = @transform_1, window_bounds = array<i64: 8, 48>}, {pipeline_mode = #tpu.pipeline_mode<synchronous>, transform_indices = @transform_2, window_bounds = array<i64: 48, 64>}, {pipeline_mode = #tpu.pipeline_mode<synchronous>, transform_indices = @transform_3, window_bounds = array<i64: 48, 64>}, {pipeline_mode = #tpu.pipeline_mode<synchronous>, transform_indices = @transform_4, window_bounds = array<i64: 1, 128>}, {transform_indices = @transform_5, window_bounds = array<i64: 8, 128>}]} {
    %c0 = arith.constant 0 : index
    %c0_0 = arith.constant 0 : index
    %0 = vector.load %arg1[%c0, %c0_0] : memref<8x48xf32, #tpu.memory_space<vmem>>, vector<8x48xf32>
    %c0_1 = arith.constant 0 : index
    %c0_2 = arith.constant 0 : index
    %1 = vector.load %arg3[%c0_1, %c0_2] : memref<48x64xf32, #tpu.memory_space<vmem>>, vector<48x64xf32>
    %cst = arith.constant dense<0.000000e+00> : vector<8x64xf32>
    %2 = tpu.matmul %0, %1, %cst {dimension_numbers = #tpu.dot_dimension_numbers<[1], [0], [0], [1], [0, 0, 1, 1], [], []>} : vector<8x48xf32>, vector<48x64xf32>, vector<8x64xf32> -> vector<8x64xf32>
    %c0_3 = arith.constant 0 : index
    %c0_4 = arith.constant 0 : index
    %3 = vector.load %arg2[%c0_3, %c0_4] : memref<8x48xf32, #tpu.memory_space<vmem>>, vector<8x48xf32>
    %c0_5 = arith.constant 0 : index
    %c0_6 = arith.constant 0 : index
    %4 = vector.load %arg4[%c0_5, %c0_6] : memref<48x64xf32, #tpu.memory_space<vmem>>, vector<48x64xf32>
    %cst_7 = arith.constant dense<0.000000e+00> : vector<8x64xf32>
    %5 = tpu.matmul %3, %4, %cst_7 {dimension_numbers = #tpu.dot_dimension_numbers<[1], [0], [0], [1], [0, 0, 1, 1], [], []>} : vector<8x48xf32>, vector<48x64xf32>, vector<8x64xf32> -> vector<8x64xf32>
    %6 = tpu.concatenate %2, %5 in 1 : vector<8x64xf32>, vector<8x64xf32> -> vector<8x128xf32>
    %c0_8 = arith.constant 0 : index
    %c0_9 = arith.constant 0 : index
    %7 = vector.load %arg5[%c0_8, %c0_9] : memref<1x128xf32, #tpu.memory_space<vmem>>, vector<1x128xf32>
    %8 = vector.broadcast %7 : vector<1x128xf32> to vector<8x128xf32>
    %9 = arith.addf %6, %8 : vector<8x128xf32>
    %c0_10 = arith.constant 0 : index
    %c0_11 = arith.constant 0 : index
    %10 = vector.load %arg6[%c0_10, %c0_11] : memref<8x128xf32, #tpu.memory_space<vmem>>, vector<8x128xf32>
    tpu.vector_store %arg6[%c0_10, %c0_11], %9 {strides = array<i32>} : memref<8x128xf32, #tpu.memory_space<vmem>>, vector<8x128xf32>,
    return
  }
  func.func @transform_0(%arg0: i32) -> (i32, i32) {
    %c0_i32 = arith.constant 0 : i32
    %c0_i32_0 = arith.constant 0 : i32
    return %arg0, %c0_i32 : i32, i32
  }
  func.func @transform_1(%arg0: i32) -> (i32, i32) {
    %c0_i32 = arith.constant 0 : i32
    %c0_i32_0 = arith.constant 0 : i32
    return %arg0, %c0_i32 : i32, i32
  }
  func.func @transform_2(%arg0: i32) -> (i32, i32) {
    %c0_i32 = arith.constant 0 : i32
    %c0_i32_0 = arith.constant 0 : i32
    %c0_i32_1 = arith.constant 0 : i32
    return %c0_i32, %c0_i32_0 : i32, i32
  }
  func.func @transform_3(%arg0: i32) -> (i32, i32) {
    %c0_i32 = arith.constant 0 : i32
    %c0_i32_0 = arith.constant 0 : i32
    %c0_i32_1 = arith.constant 0 : i32
    return %c0_i32, %c0_i32_0 : i32, i32
  }
  func.func @transform_4(%arg0: i32) -> (i32, i32) {
    %c0_i32 = arith.constant 0 : i32
    %c0_i32_0 = arith.constant 0 : i32
    %c0_i32_1 = arith.constant 0 : i32
    return %c0_i32, %c0_i32_0 : i32, i32
  }
  func.func @transform_5(%arg0: i32) -> (i32, i32) {
    %c0_i32 = arith.constant 0 : i32
    %c0_i32_0 = arith.constant 0 : i32
    return %arg0, %c0_i32 : i32, i32
  }
}

</mosaic_0001>

<llo_original>
// kernel: tpu_custom_call.1
$region0: #{tpu_custom_call.1}
  #allocation0 [shape = 'u32[]', space=smem, size = 0x4, offset = 0x4, fixed_abs, tag = 'smem constant byte address 0x4 - core index']
  #allocation1 [shape = 'u32[144,128]{1,0:T(1,128)}', space=vmem, size = 0x12000, scoped, tag = 'internal scratch']
  %s0 = inlined_call_operand.hbm [shape: f32[8,48], index: 0, kind: input, shape index: {}]
  %s1 = inlined_call_operand.hbm [shape: f32[8,48], index: 1, kind: input, shape index: {}]
  %s2 = inlined_call_operand.hbm [shape: f32[48,64], index: 2, kind: input, shape index: {}]
  %s3 = inlined_call_operand.hbm [shape: f32[48,64], index: 3, kind: input, shape index: {}]
  %s4 = inlined_call_operand.vmem [shape: f32[1,128], index: 4, kind: input, shape index: {}]
  %s5 = inlined_call_operand.hbm [shape: f32[8,128], index: 5, kind: output, shape index: {}]
  %s6 = sld [smem:[#allocation0]]
  $region46: #{tpu_custom_call.1} parent=0
    _
  %s8 = ssub.s32 1, %s6
  %s9 = scalar_select 0, %s8, %s6
  $region1: #{tpu_custom_call.1} parent=0
    #allocation2 [shape = 'u8[4096]{0}', space=vmem, size = 0x1000, scoped, tag = 'input window, operand 0, single buffered']
    #allocation3 [shape = 's32[1]{0}', space=sflag, size = 0x4, scoped, tag = 'scoped memory for tpu_custom_call.1']
    #allocation4 [shape = 's32[1]{0}', space=sflag, size = 0x4, scoped, tag = 'scoped memory for tpu_custom_call.1']
    #allocation5 [shape = 'u8[4096]{0}', space=vmem, size = 0x1000, scoped, tag = 'input window, operand 1, single buffered']
    #allocation6 [shape = 's32[1]{0}', space=sflag, size = 0x4, scoped, tag = 'scoped memory for tpu_custom_call.1']
    #allocation7 [shape = 'u8[24576]{0}', space=vmem, size = 0x6000, scoped, tag = 'input window, operand 2, single buffered']
    #allocation8 [shape = 'u8[24576]{0}', space=vmem, size = 0x6000, scoped, tag = 'input window, operand 3, single buffered']
    #allocation9 [shape = 's32[1]{0}', space=sflag, size = 0x4, scoped, tag = 'scoped memory for tpu_custom_call.1']
    #allocation10 [shape = 'u8[4096]{0}', space=vmem, size = 0x1000, scoped, tag = 'output window, operand 0, single buffered']
    %10 = vsyncpa [#allocation3], 0
    %11 = vsyncpa [#allocation6], 0
    %12 = vsyncpa [#allocation9], 0
    %13 = vsyncpa [#allocation4], 0
    // Predicated region
    $region2: #{tpu_custom_call.1} parent=1 // pred_check
      _
    $region3: #{tpu_custom_call.1} parent=1 // pred_check_branch
      %15 = sbr.rel (0) target = $region5
    $region4: #{tpu_custom_call.1} parent=1 // pred_region
      %s17 = ssub.s32 128, 128
      %18 = vsyncadd [#allocation3], %s17
      %s20 = sshll.u32 [#allocation2], 4
      %s21 = int_to_ptr.vmem [resolvable:$true] %s20
      %23 = dma.hbm_to_vmem [thread:$0]  %s0, 128, %s21, [#allocation3]
    $region5: #{tpu_custom_call.1} parent=1 // pred_fallthru
      _
    // Predicated region
    $region6: #{tpu_custom_call.1} parent=1 // pred_check
      _
    $region7: #{tpu_custom_call.1} parent=1 // pred_check_branch
      %25 = sbr.rel (0) target = $region9
    $region8: #{tpu_custom_call.1} parent=1 // pred_region
      %s27 = ssub.s32 128, 128
      %28 = vsyncadd [#allocation6], %s27
      %s30 = sshll.u32 [#allocation5], 4
      %s31 = int_to_ptr.vmem [resolvable:$true] %s30
      %33 = dma.hbm_to_vmem [thread:$0]  %s1, 128, %s31, [#allocation6]
    $region9: #{tpu_custom_call.1} parent=1 // pred_fallthru
      _
    // Predicated region
    $region10: #{tpu_custom_call.1} parent=1 // pred_check
      _
    $region11: #{tpu_custom_call.1} parent=1 // pred_check_branch
      %35 = sbr.rel (0) target = $region13
    $region12: #{tpu_custom_call.1} parent=1 // pred_region
      %s37 = ssub.s32 768, 768
      %38 = vsyncadd [#allocation6], %s37
      %s39 = sshll.u32 [#allocation7], 4
      %s40 = int_to_ptr.vmem [resolvable:$true] %s39
      %45 = dma.hbm_to_vmem [thread:$0]  %s2, 768, %s40, [#allocation6], 128, 128, 8
    $region13: #{tpu_custom_call.1} parent=1 // pred_fallthru
      _
    // Predicated region
    $region14: #{tpu_custom_call.1} parent=1 // pred_check
      _
    $region15: #{tpu_custom_call.1} parent=1 // pred_check_branch
      %47 = sbr.rel (0) target = $region17
    $region16: #{tpu_custom_call.1} parent=1 // pred_region
      %s49 = ssub.s32 768, 768
      %50 = vsyncadd [#allocation9], %s49
      %s51 = sshll.u32 [#allocation8], 4
      %s52 = int_to_ptr.vmem [resolvable:$true] %s51
      %57 = dma.hbm_to_vmem [thread:$0]  %s3, 768, %s52, [#allocation9], 128, 128, 8
    $region17: #{tpu_custom_call.1} parent=1 // pred_fallthru
      _
    // Predicated region
    $region18: #{tpu_custom_call.1} parent=1 // pred_check
      _
    $region19: #{tpu_custom_call.1} parent=1 // pred_check_branch
      %59 = sbr.rel (0) target = $region21
    $region20: #{tpu_custom_call.1} parent=1 // pred_region
      _
    $region21: #{tpu_custom_call.1} parent=1 // pred_fallthru
      _
    // Predicated region
    $region22: #{tpu_custom_call.1} parent=1 // pred_check
      _
    $region23: #{tpu_custom_call.1} parent=1 // pred_check_branch
      %61 = sbr.rel (0) target = $region25
    $region24: #{tpu_custom_call.1} parent=1 // pred_region
      %62 = dma.done [#allocation3], 128
    $region25: #{tpu_custom_call.1} parent=1 // pred_fallthru
      _
    // Predicated region
    $region26: #{tpu_custom_call.1} parent=1 // pred_check
      _
    $region27: #{tpu_custom_call.1} parent=1 // pred_check_branch
      %64 = sbr.rel (0) target = $region29
    $region28: #{tpu_custom_call.1} parent=1 // pred_region
      %65 = dma.done [#allocation6], 128
    $region29: #{tpu_custom_call.1} parent=1 // pred_fallthru
      _
    // Predicated region
    $region30: #{tpu_custom_call.1} parent=1 // pred_check
      _
    $region31: #{tpu_custom_call.1} parent=1 // pred_check_branch
      %67 = sbr.rel (0) target = $region33
    $region32: #{tpu_custom_call.1} parent=1 // pred_region
      %68 = dma.done [#allocation6], 768
    $region33: #{tpu_custom_call.1} parent=1 // pred_fallthru
      _
    // Predicated region
    $region34: #{tpu_custom_call.1} parent=1 // pred_check
      _
    $region35: #{tpu_custom_call.1} parent=1 // pred_check_branch
      %70 = sbr.rel (0) target = $region37
    $region36: #{tpu_custom_call.1} parent=1 // pred_region
      %71 = dma.done [#allocation9], 768
    $region37: #{tpu_custom_call.1} parent=1 // pred_fallthru
      _
    %v72 = vld [vmem:[#allocation2] sm:$0xff]
    %v73 = vld [vmem:[#allocation7] sm:$0xff]
    %v74 = vld [vmem:[#allocation7 + $0x8] sm:$0xff]
    %v75 = vld [vmem:[#allocation7 + $0x10] sm:$0xff]
    %v76 = vld [vmem:[#allocation7 + $0x18] sm:$0xff]
    %v77 = vld [vmem:[#allocation7 + $0x20] sm:$0xff]
    %v78 = vld [vmem:[#allocation7 + $0x28] sm:$0xff]
    %vm79 = vcmask 392192
    %v81 = vsel %vm79, %v72, 0
    %83 = vmatprep.subr.mxu0 0.0
    %84 = vmatpush1.msra.mxu0 0.0
    %85 = vmatprep.subr.mxu0 0.0
    %86 = vmatpush1.msra.mxu0 0.0
    %87 = vmatprep.subr.mxu0 0.0
    %88 = vmatpush1.msra.mxu0 0.0
    %89 = vmatprep.subr.mxu0 0.0
    %90 = vmatpush1.msra.mxu0 0.0
    %91 = vmatprep.subr.mxu0 0.0
    %92 = vmatpush1.msra.mxu0 0.0
    %93 = vmatprep.subr.mxu0 0.0
    %94 = vmatpush1.msra.mxu0 0.0
    %95 = vmatprep.subr.mxu0 0.0
    %96 = vmatpush1.msra.mxu0 0.0
    %97 = vmatprep.subr.mxu0 0.0
    %98 = vmatpush1.msra.mxu0 0.0
    %99 = vmatprep.subr.mxu0 0.0
    %100 = vmatpush1.msra.mxu0 0.0
    %101 = vmatprep.subr.mxu0 0.0
    %102 = vmatpush1.msra.mxu0 0.0
    %103 = vmatprep.subr.mxu0 0.0
    %104 = vmatpush1.msra.mxu0 %v78
    %105 = vmatprep.subr.mxu0 0.0
    %106 = vmatpush1.msra.mxu0 %v77
    %107 = vmatprep.subr.mxu0 0.0
    %108 = vmatpush1.msra.mxu0 %v76
    %109 = vmatprep.subr.mxu0 0.0
    %110 = vmatpush1.msra.mxu0 %v75
    %111 = vmatprep.subr.mxu0 0.0
    %112 = vmatpush1.msra.mxu0 %v74
    %113 = vmatprep.subr.mxu0 0.0
    %114 = vmatpush1.msra.mxu0 %v73
    %115 = vmatprep.subr.mxu0 0.0
    %116 = vmatpush2.msra.mxu0 0.0
    %117 = vmatprep.subr.mxu0 0.0
    %118 = vmatpush2.msra.mxu0 0.0
    %119 = vmatprep.subr.mxu0 0.0
    %120 = vmatpush2.msra.mxu0 0.0
    %121 = vmatprep.subr.mxu0 0.0
    %122 = vmatpush2.msra.mxu0 0.0
    %123 = vmatprep.subr.mxu0 0.0
    %124 = vmatpush2.msra.mxu0 0.0
    %125 = vmatprep.subr.mxu0 0.0
    %126 = vmatpush2.msra.mxu0 0.0
    %127 = vmatprep.subr.mxu0 0.0
    %128 = vmatpush2.msra.mxu0 0.0
    %129 = vmatprep.subr.mxu0 0.0
    %130 = vmatpush2.msra.mxu0 0.0
    %131 = vmatprep.subr.mxu0 0.0
    %132 = vmatpush2.msra.mxu0 0.0
    %133 = vmatprep.subr.mxu0 0.0
    %134 = vmatpush2.msra.mxu0 0.0
    %135 = vmatprep.subr.mxu0 0.0
    %136 = vmatpush2.msra.mxu0 0.0
    %137 = vmatprep.subr.mxu0 0.0
    %138 = vmatpush2.msra.mxu0 0.0
    %139 = vmatprep.subr.mxu0 0.0
    %140 = vmatpush2.msra.mxu0 0.0
    %141 = vmatprep.subr.mxu0 0.0
    %142 = vmatpush2.msra.mxu0 0.0
    %143 = vmatprep.subr.mxu0 0.0
    %144 = vmatpush2.msra.mxu0 0.0
    %145 = vmatprep.subr.mxu0 0.0
    %146 = vmatpush2.msra.mxu0 0.0
    %147 = vmatprep.mubr.f32.mxu0 0.0
    %148 = vmatmul.mubr.f32.gmra.mxu0 %v81
    %v149 = vpop.f32.mrf.mxu0
    %v150 = vadd.f32 0.0, %v149
    %v151 = vpop.f32.mrf.mxu0
    %152 = vdwg.mxu0
    %v153 = vld [vmem:[#allocation5] sm:$0xff]
    %v154 = vld [vmem:[#allocation8] sm:$0xff]
    %v155 = vld [vmem:[#allocation8 + $0x8] sm:$0xff]
    %v156 = vld [vmem:[#allocation8 + $0x10] sm:$0xff]
    %v157 = vld [vmem:[#allocation8 + $0x18] sm:$0xff]
    %v158 = vld [vmem:[#allocation8 + $0x20] sm:$0xff]
    %v159 = vld [vmem:[#allocation8 + $0x28] sm:$0xff]
    %v161 = vsel %vm79, %v153, 0
    %163 = vmatprep.subr.mxu0 0.0
    %164 = vmatpush1.msra.mxu0 0.0
    %165 = vmatprep.subr.mxu0 0.0
    %166 = vmatpush1.msra.mxu0 0.0
    %167 = vmatprep.subr.mxu0 0.0
    %168 = vmatpush1.msra.mxu0 0.0
    %169 = vmatprep.subr.mxu0 0.0
    %170 = vmatpush1.msra.mxu0 0.0
    %171 = vmatprep.subr.mxu0 0.0
    %172 = vmatpush1.msra.mxu0 0.0
    %173 = vmatprep.subr.mxu0 0.0
    %174 = vmatpush1.msra.mxu0 0.0
    %175 = vmatprep.subr.mxu0 0.0
    %176 = vmatpush1.msra.mxu0 0.0
    %177 = vmatprep.subr.mxu0 0.0
    %178 = vmatpush1.msra.mxu0 0.0
    %179 = vmatprep.subr.mxu0 0.0
    %180 = vmatpush1.msra.mxu0 0.0
    %181 = vmatprep.subr.mxu0 0.0
    %182 = vmatpush1.msra.mxu0 0.0
    %183 = vmatprep.subr.mxu0 0.0
    %184 = vmatpush1.msra.mxu0 %v159
    %185 = vmatprep.subr.mxu0 0.0
    %186 = vmatpush1.msra.mxu0 %v158
    %187 = vmatprep.subr.mxu0 0.0
    %188 = vmatpush1.msra.mxu0 %v157
    %189 = vmatprep.subr.mxu0 0.0
    %190 = vmatpush1.msra.mxu0 %v156
    %191 = vmatprep.subr.mxu0 0.0
    %192 = vmatpush1.msra.mxu0 %v155
    %193 = vmatprep.subr.mxu0 0.0
    %194 = vmatpush1.msra.mxu0 %v154
    %195 = vmatprep.subr.mxu0 0.0
    %196 = vmatpush2.msra.mxu0 0.0
    %197 = vmatprep.subr.mxu0 0.0
    %198 = vmatpush2.msra.mxu0 0.0
    %199 = vmatprep.subr.mxu0 0.0
    %200 = vmatpush2.msra.mxu0 0.0
    %201 = vmatprep.subr.mxu0 0.0
    %202 = vmatpush2.msra.mxu0 0.0
    %203 = vmatprep.subr.mxu0 0.0
    %204 = vmatpush2.msra.mxu0 0.0
    %205 = vmatprep.subr.mxu0 0.0
    %206 = vmatpush2.msra.mxu0 0.0
    %207 = vmatprep.subr.mxu0 0.0
    %208 = vmatpush2.msra.mxu0 0.0
    %209 = vmatprep.subr.mxu0 0.0
    %210 = vmatpush2.msra.mxu0 0.0
    %211 = vmatprep.subr.mxu0 0.0
    %212 = vmatpush2.msra.mxu0 0.0
    %213 = vmatprep.subr.mxu0 0.0
    %214 = vmatpush2.msra.mxu0 0.0
    %215 = vmatprep.subr.mxu0 0.0
    %216 = vmatpush2.msra.mxu0 0.0
    %217 = vmatprep.subr.mxu0 0.0
    %218 = vmatpush2.msra.mxu0 0.0
    %219 = vmatprep.subr.mxu0 0.0
    %220 = vmatpush2.msra.mxu0 0.0
    %221 = vmatprep.subr.mxu0 0.0
    %222 = vmatpush2.msra.mxu0 0.0
    %223 = vmatprep.subr.mxu0 0.0
    %224 = vmatpush2.msra.mxu0 0.0
    %225 = vmatprep.subr.mxu0 0.0
    %226 = vmatpush2.msra.mxu0 0.0
    %227 = vmatprep.mubr.f32.mxu0 0.0
    %228 = vmatmul.mubr.f32.gmra.mxu0 %v161
    %v229 = vpop.f32.mrf.mxu0
    %v230 = vadd.f32 0.0, %v229
    %v231 = vpop.f32.mrf.mxu0
    %232 = vdwg.mxu0
    %234 = vrot.lane.b32.xlu0 %v230, 64
    %v235 = vpop.permute.xlu0 %234
    %vm237 = vcmask 523264
    %v238 = vsel %vm237, %v150, %v235
    %v239 = vld [vmem:[%s4] sm:$0x1]
    %v241 = vlaneseq
    %v242 = vshrl.u32 %v241, 7
    %v243 = vsub.s32 0, %v242
    %v244 = vrot.slane %v239, %v243
    %v246 = vadd.f32 %v238, %v244
    %247 = vst [vmem:[#allocation10] sm:$0xff] %v246
    // Predicated region
    $region38: #{tpu_custom_call.1} parent=1 // pred_check
      _
    $region39: #{tpu_custom_call.1} parent=1 // pred_check_branch
      %249 = sbr.rel (0) target = $region41
    $region40: #{tpu_custom_call.1} parent=1 // pred_region
      %s251 = ssub.s32 128, 128
      %252 = vsyncadd [#allocation4], %s251
      %s254 = sshll.u32 [#allocation10], 4
      %s255 = int_to_ptr.vmem [resolvable:$true] %s254
      %257 = dma.vmem_to_hbm [thread:$0]  %s255, 128, %s5, [#allocation4]
    $region41: #{tpu_custom_call.1} parent=1 // pred_fallthru
      _
    // Predicated region
    $region42: #{tpu_custom_call.1} parent=1 // pred_check
      _
    $region43: #{tpu_custom_call.1} parent=1 // pred_check_branch
      %259 = sbr.rel (0) target = $region45
    $region44: #{tpu_custom_call.1} parent=1 // pred_region
      %260 = dma.done [#allocation4], 128
    $region45: #{tpu_custom_call.1} parent=1 // pred_fallthru
      _
    %261 = vsyncpa [#allocation3], 1
    %262 = vsyncpa [#allocation6], 1
    %263 = vsyncpa [#allocation9], 1
    %264 = vsyncpa [#allocation4], 1

</llo_original>
